<compile_context>
chip_gen: v5e
topology: v5e:2x2
jax: 0.10.0
libtpu: 0.0.40
codegen_flags: <defaults>
</compile_context>

<pallas_src>
import functools

import jax
import jax.numpy as jnp
from jax.experimental import pallas as pl
from jax.experimental.pallas import tpu as pltpu


_LANE = 128
_HID = 64


def _round_up(n, m):
    return ((n + m - 1) // m) * m


def _default_pack():
    """MXU packing factor: 4 copies (256x256) on v6e/v7x-class chips, 2 on v5e."""
    try:
        kind = jax.devices()[0].device_kind.lower()
        if "v5 lite" in kind or "v5e" in kind or "v5litepod" in kind:
            return 2
    except Exception:
        pass
    return 4


def _choose_block_elems(n, pack, max_block_elems, min_block_elems):
    """Batch elements per grid step (multiple of pack*128 lanes).

    Aims for >= 2 grid steps once the batch is non-trivial (v7x megacore sharding
    of the "parallel" grid axis), floored so per-step overhead stays amortized.
    """
    granule = pack * _LANE
    n_g = _round_up(max(n, 1), granule)
    target = _round_up((n_g + 1) // 2, granule)          # >= 2 steps when possible
    hi = max(_round_up(max_block_elems, granule), granule)
    lo = max(_round_up(min_block_elems, granule), granule)
    blk = max(min(target, hi), lo)
    return min(blk, n_g)


def _pinn_kernel(x_ref, w1_ref, b1_ref, w2_ref, b2_ref, w3_ref, b3_ref, o_ref, *, pack):
    P = pack
    xb = x_ref[...]                                     # (P, Lb) batch block
    Lb = xb.shape[-1]

    # Layer 1: Linear(1, 64) + tanh.  K == 1 -> broadcast multiply on the VPU,
    # tanh on the EUP.  Replicate each batch row HID times along sublanes; the
    # (P, 64, Lb) -> (P*64, Lb) collapse is tile-aligned (64 % 8 == 0), so it is
    # a layout no-op rather than a relayout copy.
    x_rep = jnp.broadcast_to(xb[:, None, :], (P, _HID, Lb)).reshape(P * _HID, Lb)
    h1 = jnp.tanh(w1_ref[...] * x_rep + b1_ref[...])    # (P*64, Lb)

    # Layer 2: Linear(64, 64) + tanh as an MXU matmul against the block-diagonal
    # packed weight (64P, 64P); f32 accumulation.  h1 is cast to the weight dtype
    # (bf16 fast path => single-pass MXU; f32 path => no-op cast).
    mm_dtype = w2_ref.dtype
    h2 = jnp.tanh(
        jnp.dot(w2_ref[...], h1.astype(mm_dtype), preferred_element_type=jnp.float32)
        + b2_ref[...]
    )                                                   # (P*64, Lb)

    # Layer 3: Linear(64, 1) as an MXU matmul with the (P, 64P) packed w3 (keeps
    # the reduction off the XLU); scalar bias comes from SMEM, folded into store.
    out = jnp.dot(w3_ref[...], h2.astype(w3_ref.dtype),
                  preferred_element_type=jnp.float32)   # (P, Lb)
    o_ref[...] = (out + b3_ref[0]).astype(o_ref.dtype)


def pinn_forward(x, params, *, pack=None, use_bf16_matmul=False,
                 max_block_elems=8192, min_block_elems=2048):
    """x: (N, 1) float32 (any N); returns (N, 1) float32."""
    w1, b1, w2, b2, w3, b3 = params
    N = x.shape[0]
    P = _default_pack() if pack is None else pack

    blk = _choose_block_elems(N, P, max_block_elems, min_block_elems)
    Lb = blk // P
    n_pad = _round_up(_round_up(max(N, 1), P * _LANE), blk)
    n_cols = n_pad // P

    # Lane-dense batch layout: (P, n_cols); row-major flatten/reshape round-trip
    # is the identity mapping, so no index bookkeeping is needed for the output.
    xf = x.reshape(-1).astype(jnp.float32)
    if n_pad != N:
        xf = jnp.concatenate([xf, jnp.zeros((n_pad - N,), jnp.float32)])
    x2 = xf.reshape(P, n_cols)

    # Weight packing (wrapper-side): tile w1/b1/b2 P times along the output dim,
    # block-diagonal-pack w2 and w3 so the stationary MXU operands fill the array.
    mm_dtype = jnp.bfloat16 if use_bf16_matmul else jnp.float32
    eye = jnp.eye(P, dtype=jnp.float32)
    w1t = jnp.tile(w1, (P, 1))                          # (64P, 1)
    b1t = jnp.tile(b1, (P, 1))                          # (64P, 1)
    w2blk = jnp.kron(eye, w2).astype(mm_dtype)          # (64P, 64P) block-diagonal
    b2t = jnp.tile(b2, (P, 1))                          # (64P, 1)
    w3blk = jnp.kron(eye, w3).astype(mm_dtype)          # (P, 64P) block-structured
    b3s = b3.astype(jnp.float32)                        # (1,) scalar via SMEM

    grid = (n_pad // blk,)
    const = lambda shape: pl.BlockSpec(shape, lambda i: (0, 0))  # resident weights

    # VMEM budget: packed weights (double-buffered), x/out blocks, f32 intermediates.
    bytes_w = 2 * (w2blk.size * w2blk.dtype.itemsize
                   + w3blk.size * w3blk.dtype.itemsize
                   + (w1t.size + b1t.size + b2t.size) * 4)
    bytes_io = 2 * 2 * (P * Lb * 4)                     # double-buffered x and out
    bytes_act = 8 * (_HID * P * Lb * 4)                 # h1/h2/x_rep/matmul temporaries
    vmem_limit = int(min(max(bytes_w + bytes_io + bytes_act + (4 << 20), 32 << 20),
                         64 << 20))

    kernel = functools.partial(_pinn_kernel, pack=P)
    out2 = pl.pallas_call(
        kernel,
        out_shape=jax.ShapeDtypeStruct((P, n_cols), jnp.float32),
        grid_spec=pltpu.PrefetchScalarGridSpec(
            num_scalar_prefetch=0,
            grid=grid,
            in_specs=[
                pl.BlockSpec((P, Lb), lambda i: (0, i)),            # x block (lanes)
                const((P * _HID, 1)),                               # w1 tiled
                const((P * _HID, 1)),                               # b1 tiled
                const((P * _HID, P * _HID)),                        # w2 block-diag
                const((P * _HID, 1)),                               # b2 tiled
                const((P, P * _HID)),                               # w3 packed
                pl.BlockSpec(memory_space=pltpu.MemorySpace.SMEM),  # b3 scalar
            ],
            out_specs=pl.BlockSpec((P, Lb), lambda i: (0, i)),
        ),
        compiler_params=pltpu.CompilerParams(
            dimension_semantics=("parallel",),
            vmem_limit_bytes=vmem_limit,
        ),
    )(x2, w1t, b1t, w2blk, b2t, w3blk, b3s)

    return out2.reshape(-1)[:N].reshape(N, 1)


def init_params(key):
    """PyTorch-layout params with nn.Linear-style U(-1/sqrt(fan_in), +) init."""
    ks = jax.random.split(key, 6)

    def unif(k, shape, fan_in):
        bound = 1.0 / jnp.sqrt(jnp.float32(fan_in))
        return jax.random.uniform(k, shape, jnp.float32, -bound, bound)

    w1 = unif(ks[0], (64, 1), 1)      # Linear(1, 64).weight  (out, in)
    b1 = unif(ks[1], (64, 1), 1)      # Linear(1, 64).bias    (as column)
    w2 = unif(ks[2], (64, 64), 64)    # Linear(64, 64).weight (out, in)
    b2 = unif(ks[3], (64, 1), 64)     # Linear(64, 64).bias   (as column)
    w3 = unif(ks[4], (1, 64), 64)     # Linear(64, 1).weight  (out, in)
    b3 = unif(ks[5], (1,), 64)        # Linear(64, 1).bias
    return (w1, b1, w2, b2, w3, b3)


def pinn_forward_ref(x, params):
    """Pure-JAX reference (row-vector convention), full f32 precision."""
    w1, b1, w2, b2, w3, b3 = params
    hi = jax.lax.Precision.HIGHEST
    h1 = jnp.tanh(x * w1.T + b1.T)                              # (N, 64)
    h2 = jnp.tanh(jnp.dot(h1, w2.T, precision=hi) + b2.T)       # (N, 64)
    return jnp.dot(h2, w3.T, precision=hi) + b3                 # (N, 1)


if __name__ == "__main__":
    key = jax.random.PRNGKey(0)
    kp, kx1, kx2 = jax.random.split(key, 3)
    params = init_params(kp)

    # Small ragged batch (not a multiple of 128): single grid step, f32 MXU path.
    N1 = 300
    x1 = jax.random.uniform(kx1, (N1, 1), jnp.float32, 0.0, 10.0)
    y1 = jax.block_until_ready(pinn_forward(x1, params))
    assert y1.shape == (N1, 1)
    assert jnp.allclose(y1, pinn_forward_ref(x1, params), atol=1e-4, rtol=1e-4)

    # Larger batch forcing a multi-step "parallel" grid (>= 2 blocks / megacore).
    N2 = 1200
    x2 = jax.random.uniform(kx2, (N2, 1), jnp.float32, 0.0, 10.0)
    y2 = jax.block_until_ready(
        pinn_forward(x2, params, max_block_elems=1024, min_block_elems=512))
    assert y2.shape == (N2, 1)
    assert jnp.allclose(y2, pinn_forward_ref(x2, params), atol=1e-4, rtol=1e-4)

    # bf16 single-pass-MXU fast path (reduced precision; keep the f32 default when
    # this forward feeds jax.grad for the physics-loss derivatives).
    y3 = jax.block_until_ready(pinn_forward(x2, params, use_bf16_matmul=True))
    assert y3.shape == (N2, 1)
    assert float(jnp.max(jnp.abs(y3 - pinn_forward_ref(x2, params)))) < 1e-1

    # TODO(synk): physics_loss needs d(theta)/dx and d2(theta)/dx2 -> compute with
    # jax.grad / jax.jacfwd on top of this forward outside the kernel if required.
    print("KERNEL_OK")
</pallas_src>

<mosaic_0001>
module attributes {stable_mosaic.version = 11 : i64} {
  func.func @_pinn_kernel(%arg0: i32, %arg1: memref<4x128xf32, #tpu.memory_space<vmem>>, %arg2: memref<256x1xf32, #tpu.memory_space<vmem>>, %arg3: memref<256x1xf32, #tpu.memory_space<vmem>>, %arg4: memref<256x256xf32, #tpu.memory_space<vmem>>, %arg5: memref<256x1xf32, #tpu.memory_space<vmem>>, %arg6: memref<4x256xf32, #tpu.memory_space<vmem>>, %arg7: memref<1xf32, #tpu.memory_space<smem>>, %arg8: memref<4x128xf32, #tpu.memory_space<vmem>>) attributes {dimension_semantics = [#tpu.dimension_semantics<parallel>], iteration_bounds = array<i64: 1>, scalar_prefetch = 0 : i64, scratch_operands = 0 : i64, tpu.core_type = #tpu.core_type<tc>, window_params = [{transform_indices = @transform_0, window_bounds = array<i64: 4, 128>}, {pipeline_mode = #tpu.pipeline_mode<synchronous>, transform_indices = @transform_1, window_bounds = array<i64: 256, 1>}, {pipeline_mode = #tpu.pipeline_mode<synchronous>, transform_indices = @transform_2, window_bounds = array<i64: 256, 1>}, {pipeline_mode = #tpu.pipeline_mode<synchronous>, transform_indices = @transform_3, window_bounds = array<i64: 256, 256>}, {pipeline_mode = #tpu.pipeline_mode<synchronous>, transform_indices = @transform_4, window_bounds = array<i64: 256, 1>}, {pipeline_mode = #tpu.pipeline_mode<synchronous>, transform_indices = @transform_5, window_bounds = array<i64: 4, 256>}, {transform_indices = @transform_6, window_bounds = array<i64: 1>}, {transform_indices = @transform_7, window_bounds = array<i64: 4, 128>}]} {
    %c0 = arith.constant 0 : index
    %c0_0 = arith.constant 0 : index
    %0 = vector.load %arg1[%c0, %c0_0] : memref<4x128xf32, #tpu.memory_space<vmem>>, vector<4x128xf32>
    %1 = vector.shape_cast %0 : vector<4x128xf32> to vector<4x1x128xf32>
    %2 = vector.shape_cast %1 : vector<4x1x128xf32> to vector<4x1x128xf32>
    %3 = vector.broadcast %2 : vector<4x1x128xf32> to vector<4x64x128xf32>
    %4 = vector.shape_cast %3 : vector<4x64x128xf32> to vector<256x128xf32>
    %c0_1 = arith.constant 0 : index
    %c0_2 = arith.constant 0 : index
    %5 = vector.load %arg2[%c0_1, %c0_2] : memref<256x1xf32, #tpu.memory_space<vmem>>, vector<256x1xf32>
    %6 = vector.broadcast %5 : vector<256x1xf32> to vector<256x128xf32>
    %7 = arith.mulf %6, %4 : vector<256x128xf32>
    %c0_3 = arith.constant 0 : index
    %c0_4 = arith.constant 0 : index
    %8 = vector.load %arg3[%c0_3, %c0_4] : memref<256x1xf32, #tpu.memory_space<vmem>>, vector<256x1xf32>
    %9 = vector.broadcast %8 : vector<256x1xf32> to vector<256x128xf32>
    %10 = arith.addf %7, %9 : vector<256x128xf32>
    %11 = math.tanh %10 : vector<256x128xf32>
    %c0_5 = arith.constant 0 : index
    %c0_6 = arith.constant 0 : index
    %12 = vector.load %arg4[%c0_5, %c0_6] : memref<256x256xf32, #tpu.memory_space<vmem>>, vector<256x256xf32>
    %cst = arith.constant dense<0.000000e+00> : vector<256x128xf32>
    %13 = tpu.matmul %12, %11, %cst {dimension_numbers = #tpu.dot_dimension_numbers<[1], [0], [0], [1], [0, 0, 1, 1], [], []>} : vector<256x256xf32>, vector<256x128xf32>, vector<256x128xf32> -> vector<256x128xf32>
    %c0_7 = arith.constant 0 : index
    %c0_8 = arith.constant 0 : index
    %14 = vector.load %arg5[%c0_7, %c0_8] : memref<256x1xf32, #tpu.memory_space<vmem>>, vector<256x1xf32>
    %15 = vector.broadcast %14 : vector<256x1xf32> to vector<256x128xf32>
    %16 = arith.addf %13, %15 : vector<256x128xf32>
    %17 = math.tanh %16 : vector<256x128xf32>
    %c0_9 = arith.constant 0 : index
    %c0_10 = arith.constant 0 : index
    %18 = vector.load %arg6[%c0_9, %c0_10] : memref<4x256xf32, #tpu.memory_space<vmem>>, vector<4x256xf32>
    %cst_11 = arith.constant dense<0.000000e+00> : vector<4x128xf32>
    %19 = tpu.matmul %18, %17, %cst_11 {dimension_numbers = #tpu.dot_dimension_numbers<[1], [0], [0], [1], [0, 0, 1, 1], [], []>} : vector<4x256xf32>, vector<256x128xf32>, vector<4x128xf32> -> vector<4x128xf32>
    %c0_12 = arith.constant 0 : index
    %20 = memref.load %arg7[%c0_12] : memref<1xf32, #tpu.memory_space<smem>>
    %21 = vector.broadcast %20 : f32 to vector<4x128xf32>
    %22 = arith.addf %19, %21 : vector<4x128xf32>
    %c0_13 = arith.constant 0 : index
    %c0_14 = arith.constant 0 : index
    %23 = vector.load %arg8[%c0_13, %c0_14] : memref<4x128xf32, #tpu.memory_space<vmem>>, vector<4x128xf32>
    tpu.vector_store %arg8[%c0_13, %c0_14], %22 {strides = array<i32>} : memref<4x128xf32, #tpu.memory_space<vmem>>, vector<4x128xf32>,
    return
  }
  func.func @transform_0(%arg0: i32) -> (i32, i32) {
    %c0_i32 = arith.constant 0 : i32
    %c0_i32_0 = arith.constant 0 : i32
    return %c0_i32, %arg0 : i32, i32
  }
  func.func @transform_1(%arg0: i32) -> (i32, i32) {
    %c0_i32 = arith.constant 0 : i32
    %c0_i32_0 = arith.constant 0 : i32
    %c0_i32_1 = arith.constant 0 : i32
    return %c0_i32, %c0_i32_0 : i32, i32
  }
  func.func @transform_2(%arg0: i32) -> (i32, i32) {
    %c0_i32 = arith.constant 0 : i32
    %c0_i32_0 = arith.constant 0 : i32
    %c0_i32_1 = arith.constant 0 : i32
    return %c0_i32, %c0_i32_0 : i32, i32
  }
  func.func @transform_3(%arg0: i32) -> (i32, i32) {
    %c0_i32 = arith.constant 0 : i32
    %c0_i32_0 = arith.constant 0 : i32
    %c0_i32_1 = arith.constant 0 : i32
    return %c0_i32, %c0_i32_0 : i32, i32
  }
  func.func @transform_4(%arg0: i32) -> (i32, i32) {
    %c0_i32 = arith.constant 0 : i32
    %c0_i32_0 = arith.constant 0 : i32
    %c0_i32_1 = arith.constant 0 : i32
    return %c0_i32, %c0_i32_0 : i32, i32
  }
  func.func @transform_5(%arg0: i32) -> (i32, i32) {
    %c0_i32 = arith.constant 0 : i32
    %c0_i32_0 = arith.constant 0 : i32
    %c0_i32_1 = arith.constant 0 : i32
    return %c0_i32, %c0_i32_0 : i32, i32
  }
  func.func @transform_6(%arg0: i32) -> i32 {
    %c0_i32 = arith.constant 0 : i32
    %c0_i32_0 = arith.constant 0 : i32
    return %c0_i32 : i32
  }
  func.func @transform_7(%arg0: i32) -> (i32, i32) {
    %c0_i32 = arith.constant 0 : i32
    %c0_i32_0 = arith.constant 0 : i32
    return %c0_i32, %arg0 : i32, i32
  }
}

</mosaic_0001>

<llo_original>
// kernel: tpu_custom_call.1
$region0: #{tpu_custom_call.1}
  #allocation0 [shape = 'u32[]', space=smem, size = 0x4, offset = 0x4, fixed_abs, tag = 'smem constant byte address 0x4 - core index']
  #allocation1 [shape = 'u32[72,128]{1,0:T(1,128)}', space=vmem, size = 0x9000, scoped, tag = 'internal scratch']
  #allocation2 [shape = 'f32[1]{0:T(128)S(6)}', space=smem, size = 0x200, scoped, tag = 'scoped memory for tpu_custom_call.1']
  %s0 = inlined_call_operand.vmem [shape: f32[4,128], index: 0, kind: input, shape index: {}]
  %s1 = inlined_call_operand.vmem [shape: f32[256,1], index: 1, kind: input, shape index: {}]
  %s2 = inlined_call_operand.vmem [shape: f32[256,1], index: 2, kind: input, shape index: {}]
  %s3 = inlined_call_operand.vmem [shape: f32[256,256], index: 3, kind: input, shape index: {}]
  %s4 = inlined_call_operand.vmem [shape: f32[256,1], index: 4, kind: input, shape index: {}]
  %s5 = inlined_call_operand.vmem [shape: f32[4,256], index: 5, kind: input, shape index: {}]
  %s6 = inlined_call_operand.<no memory space> [shape: f32[1], index: 6, kind: input, shape index: {}]
  %s7 = inlined_call_operand.hbm [shape: f32[4,128], index: 7, kind: output, shape index: {}]
  %s8 = sld [smem:[#allocation0]]
  $region38: #{tpu_custom_call.1} parent=0
    _
  %s10 = ssub.s32 1, %s8
  %s11 = scalar_select 0, %s10, %s8
  %12 = sst [smem:[#allocation2]] %s6
  $region1: #{tpu_custom_call.1} parent=0
    #allocation3 [shape = 'u8[2048]{0}', space=vmem, size = 0x800, scoped, tag = 'output window, operand 0, single buffered']
    #allocation4 [shape = 's32[1]{0}', space=sflag, size = 0x4, scoped, tag = 'scoped memory for tpu_custom_call.1']
    %13 = vsyncpa [#allocation4], 0
    // Predicated region
    $region2: #{tpu_custom_call.1} parent=1 // pred_check
      _
    $region3: #{tpu_custom_call.1} parent=1 // pred_check_branch
      %15 = sbr.rel (0) target = $region5
    $region4: #{tpu_custom_call.1} parent=1 // pred_region
      _
    $region5: #{tpu_custom_call.1} parent=1 // pred_fallthru
      _
    // Predicated region
    $region6: #{tpu_custom_call.1} parent=1 // pred_check
      _
    $region7: #{tpu_custom_call.1} parent=1 // pred_check_branch
      %17 = sbr.rel (0) target = $region9
    $region8: #{tpu_custom_call.1} parent=1 // pred_region
      _
    $region9: #{tpu_custom_call.1} parent=1 // pred_fallthru
      _
    // Predicated region
    $region10: #{tpu_custom_call.1} parent=1 // pred_check
      _
    $region11: #{tpu_custom_call.1} parent=1 // pred_check_branch
      %19 = sbr.rel (0) target = $region13
    $region12: #{tpu_custom_call.1} parent=1 // pred_region
      _
    $region13: #{tpu_custom_call.1} parent=1 // pred_fallthru
      _
    // Predicated region
    $region14: #{tpu_custom_call.1} parent=1 // pred_check
      _
    $region15: #{tpu_custom_call.1} parent=1 // pred_check_branch
      %21 = sbr.rel (0) target = $region17
    $region16: #{tpu_custom_call.1} parent=1 // pred_region
      _
    $region17: #{tpu_custom_call.1} parent=1 // pred_fallthru
      _
    // Predicated region
    $region18: #{tpu_custom_call.1} parent=1 // pred_check
      _
    $region19: #{tpu_custom_call.1} parent=1 // pred_check_branch
      %23 = sbr.rel (0) target = $region21
    $region20: #{tpu_custom_call.1} parent=1 // pred_region
      _
    $region21: #{tpu_custom_call.1} parent=1 // pred_fallthru
      _
    // Predicated region
    $region22: #{tpu_custom_call.1} parent=1 // pred_check
      _
    $region23: #{tpu_custom_call.1} parent=1 // pred_check_branch
      %25 = sbr.rel (0) target = $region25
    $region24: #{tpu_custom_call.1} parent=1 // pred_region
      _
    $region25: #{tpu_custom_call.1} parent=1 // pred_fallthru
      _
    // Predicated region
    $region26: #{tpu_custom_call.1} parent=1 // pred_check
      _
    $region27: #{tpu_custom_call.1} parent=1 // pred_check_branch
      %27 = sbr.rel (0) target = $region29
    $region28: #{tpu_custom_call.1} parent=1 // pred_region
      _
    $region29: #{tpu_custom_call.1} parent=1 // pred_fallthru
      _
    %v28 = vld [vmem:[%s0] sm:$0xf]
    %v30 = vrot.slane %v28, 1
    %v31 = vrot.slane %v28, 2
    %v32 = vrot.slane %v28, 3
    %v33 = vperm.slane %v28, 0
    %v34 = vperm.slane %v30, 0
    %v35 = vperm.slane %v31, 0
    %v36 = vperm.slane %v32, 0
    %v41 = vld [vmem:[%s1] sm:$0xff]
    %v42 = vld [vmem:[%s1 + $0x8] sm:$0xff]
    %v43 = vld [vmem:[%s1 + $0x10] sm:$0xff]
    %v44 = vld [vmem:[%s1 + $0x18] sm:$0xff]
    %v45 = vld [vmem:[%s1 + $0x20] sm:$0xff]
    %v46 = vld [vmem:[%s1 + $0x28] sm:$0xff]
    %v47 = vld [vmem:[%s1 + $0x30] sm:$0xff]
    %v48 = vld [vmem:[%s1 + $0x38] sm:$0xff]
    %v49 = vld [vmem:[%s1 + $0x40] sm:$0xff]
    %v50 = vld [vmem:[%s1 + $0x48] sm:$0xff]
    %v51 = vld [vmem:[%s1 + $0x50] sm:$0xff]
    %v52 = vld [vmem:[%s1 + $0x58] sm:$0xff]
    %v53 = vld [vmem:[%s1 + $0x60] sm:$0xff]
    %v54 = vld [vmem:[%s1 + $0x68] sm:$0xff]
    %v55 = vld [vmem:[%s1 + $0x70] sm:$0xff]
    %v56 = vld [vmem:[%s1 + $0x78] sm:$0xff]
    %v57 = vld [vmem:[%s1 + $0x80] sm:$0xff]
    %v58 = vld [vmem:[%s1 + $0x88] sm:$0xff]
    %v59 = vld [vmem:[%s1 + $0x90] sm:$0xff]
    %v60 = vld [vmem:[%s1 + $0x98] sm:$0xff]
    %v61 = vld [vmem:[%s1 + $0xa0] sm:$0xff]
    %v62 = vld [vmem:[%s1 + $0xa8] sm:$0xff]
    %v63 = vld [vmem:[%s1 + $0xb0] sm:$0xff]
    %v64 = vld [vmem:[%s1 + $0xb8] sm:$0xff]
    %v65 = vld [vmem:[%s1 + $0xc0] sm:$0xff]
    %v66 = vld [vmem:[%s1 + $0xc8] sm:$0xff]
    %v67 = vld [vmem:[%s1 + $0xd0] sm:$0xff]
    %v68 = vld [vmem:[%s1 + $0xd8] sm:$0xff]
    %v69 = vld [vmem:[%s1 + $0xe0] sm:$0xff]
    %v70 = vld [vmem:[%s1 + $0xe8] sm:$0xff]
    %v71 = vld [vmem:[%s1 + $0xf0] sm:$0xff]
    %v72 = vld [vmem:[%s1 + $0xf8] sm:$0xff]
    %74 = vset.pattern.permute.xlu0 0
    %75 = vperm.xlu0 %74, %v41
    %v76 = vpop.permute.xlu0 %75
    %79 = vset.pattern.permute.xlu0 0
    %80 = vperm.xlu0 %79, %v42
    %v81 = vpop.permute.xlu0 %80
    %84 = vset.pattern.permute.xlu0 0
    %85 = vperm.xlu0 %84, %v43
    %v86 = vpop.permute.xlu0 %85
    %89 = vset.pattern.permute.xlu0 0
    %90 = vperm.xlu0 %89, %v44
    %v91 = vpop.permute.xlu0 %90
    %94 = vset.pattern.permute.xlu0 0
    %95 = vperm.xlu0 %94, %v45
    %v96 = vpop.permute.xlu0 %95
    %99 = vset.pattern.permute.xlu0 0
    %100 = vperm.xlu0 %99, %v46
    %v101 = vpop.permute.xlu0 %100
    %104 = vset.pattern.permute.xlu0 0
    %105 = vperm.xlu0 %104, %v47
    %v106 = vpop.permute.xlu0 %105
    %109 = vset.pattern.permute.xlu0 0
    %110 = vperm.xlu0 %109, %v48
    %v111 = vpop.permute.xlu0 %110
    %114 = vset.pattern.permute.xlu0 0
    %115 = vperm.xlu0 %114, %v49
    %v116 = vpop.permute.xlu0 %115
    %119 = vset.pattern.permute.xlu0 0
    %120 = vperm.xlu0 %119, %v50
    %v121 = vpop.permute.xlu0 %120
    %124 = vset.pattern.permute.xlu0 0
    %125 = vperm.xlu0 %124, %v51
    %v126 = vpop.permute.xlu0 %125
    %129 = vset.pattern.permute.xlu0 0
    %130 = vperm.xlu0 %129, %v52
    %v131 = vpop.permute.xlu0 %130
    %134 = vset.pattern.permute.xlu0 0
    %135 = vperm.xlu0 %134, %v53
    %v136 = vpop.permute.xlu0 %135
    %139 = vset.pattern.permute.xlu0 0
    %140 = vperm.xlu0 %139, %v54
    %v141 = vpop.permute.xlu0 %140
    %144 = vset.pattern.permute.xlu0 0
    %145 = vperm.xlu0 %144, %v55
    %v146 = vpop.permute.xlu0 %145
    %149 = vset.pattern.permute.xlu0 0
    %150 = vperm.xlu0 %149, %v56
    %v151 = vpop.permute.xlu0 %150
    %154 = vset.pattern.permute.xlu0 0
    %155 = vperm.xlu0 %154, %v57
    %v156 = vpop.permute.xlu0 %155
    %159 = vset.pattern.permute.xlu0 0
    %160 = vperm.xlu0 %159, %v58
    %v161 = vpop.permute.xlu0 %160
    %164 = vset.pattern.permute.xlu0 0
    %165 = vperm.xlu0 %164, %v59
    %v166 = vpop.permute.xlu0 %165
    %169 = vset.pattern.permute.xlu0 0
    %170 = vperm.xlu0 %169, %v60
    %v171 = vpop.permute.xlu0 %170
    %174 = vset.pattern.permute.xlu0 0
    %175 = vperm.xlu0 %174, %v61
    %v176 = vpop.permute.xlu0 %175
    %179 = vset.pattern.permute.xlu0 0
    %180 = vperm.xlu0 %179, %v62
    %v181 = vpop.permute.xlu0 %180
    %184 = vset.pattern.permute.xlu0 0
    %185 = vperm.xlu0 %184, %v63
    %v186 = vpop.permute.xlu0 %185
    %189 = vset.pattern.permute.xlu0 0
    %190 = vperm.xlu0 %189, %v64
    %v191 = vpop.permute.xlu0 %190
    %194 = vset.pattern.permute.xlu0 0
    %195 = vperm.xlu0 %194, %v65
    %v196 = vpop.permute.xlu0 %195
    %199 = vset.pattern.permute.xlu0 0
    %200 = vperm.xlu0 %199, %v66
    %v201 = vpop.permute.xlu0 %200
    %204 = vset.pattern.permute.xlu0 0
    %205 = vperm.xlu0 %204, %v67
    %v206 = vpop.permute.xlu0 %205
    %209 = vset.pattern.permute.xlu0 0
    %210 = vperm.xlu0 %209, %v68
    %v211 = vpop.permute.xlu0 %210
    %214 = vset.pattern.permute.xlu0 0
    %215 = vperm.xlu0 %214, %v69
    %v216 = vpop.permute.xlu0 %215
    %219 = vset.pattern.permute.xlu0 0
    %220 = vperm.xlu0 %219, %v70
    %v221 = vpop.permute.xlu0 %220
    %224 = vset.pattern.permute.xlu0 0
    %225 = vperm.xlu0 %224, %v71
    %v226 = vpop.permute.xlu0 %225
    %229 = vset.pattern.permute.xlu0 0
    %230 = vperm.xlu0 %229, %v72
    %v231 = vpop.permute.xlu0 %230
    %v233 = vmul.f32 %v76, %v33
    %v234 = vmul.f32 %v81, %v33
    %v235 = vmul.f32 %v86, %v33
    %v236 = vmul.f32 %v91, %v33
    %v237 = vmul.f32 %v96, %v33
    %v238 = vmul.f32 %v101, %v33
    %v239 = vmul.f32 %v106, %v33
    %v240 = vmul.f32 %v111, %v33
    %v241 = vmul.f32 %v116, %v34
    %v242 = vmul.f32 %v121, %v34
    %v243 = vmul.f32 %v126, %v34
    %v244 = vmul.f32 %v131, %v34
    %v245 = vmul.f32 %v136, %v34
    %v246 = vmul.f32 %v141, %v34
    %v247 = vmul.f32 %v146, %v34
    %v248 = vmul.f32 %v151, %v34
    %v249 = vmul.f32 %v156, %v35
    %v250 = vmul.f32 %v161, %v35
    %v251 = vmul.f32 %v166, %v35
    %v252 = vmul.f32 %v171, %v35
    %v253 = vmul.f32 %v176, %v35
    %v254 = vmul.f32 %v181, %v35
    %v255 = vmul.f32 %v186, %v35
    %v256 = vmul.f32 %v191, %v35
    %v257 = vmul.f32 %v196, %v36
    %v258 = vmul.f32 %v201, %v36
    %v259 = vmul.f32 %v206, %v36
    %v260 = vmul.f32 %v211, %v36
    %v261 = vmul.f32 %v216, %v36
    %v262 = vmul.f32 %v221, %v36
    %v263 = vmul.f32 %v226, %v36
    %v264 = vmul.f32 %v231, %v36
    %v265 = vld [vmem:[%s2] sm:$0xff]
    %v266 = vld [vmem:[%s2 + $0x8] sm:$0xff]
    %v267 = vld [vmem:[%s2 + $0x10] sm:$0xff]
    %v268 = vld [vmem:[%s2 + $0x18] sm:$0xff]
    %v269 = vld [vmem:[%s2 + $0x20] sm:$0xff]
    %v270 = vld [vmem:[%s2 + $0x28] sm:$0xff]
    %v271 = vld [vmem:[%s2 + $0x30] sm:$0xff]
    %v272 = vld [vmem:[%s2 + $0x38] sm:$0xff]
    %v273 = vld [vmem:[%s2 + $0x40] sm:$0xff]
    %v274 = vld [vmem:[%s2 + $0x48] sm:$0xff]
    %v275 = vld [vmem:[%s2 + $0x50] sm:$0xff]
    %v276 = vld [vmem:[%s2 + $0x58] sm:$0xff]
    %v277 = vld [vmem:[%s2 + $0x60] sm:$0xff]
    %v278 = vld [vmem:[%s2 + $0x68] sm:$0xff]
    %v279 = vld [vmem:[%s2 + $0x70] sm:$0xff]
    %v280 = vld [vmem:[%s2 + $0x78] sm:$0xff]
    %v281 = vld [vmem:[%s2 + $0x80] sm:$0xff]
    %v282 = vld [vmem:[%s2 + $0x88] sm:$0xff]
    %v283 = vld [vmem:[%s2 + $0x90] sm:$0xff]
    %v284 = vld [vmem:[%s2 + $0x98] sm:$0xff]
    %v285 = vld [vmem:[%s2 + $0xa0] sm:$0xff]
    %v286 = vld [vmem:[%s2 + $0xa8] sm:$0xff]
    %v287 = vld [vmem:[%s2 + $0xb0] sm:$0xff]
    %v288 = vld [vmem:[%s2 + $0xb8] sm:$0xff]
    %v289 = vld [vmem:[%s2 + $0xc0] sm:$0xff]
    %v290 = vld [vmem:[%s2 + $0xc8] sm:$0xff]
    %v291 = vld [vmem:[%s2 + $0xd0] sm:$0xff]
    %v292 = vld [vmem:[%s2 + $0xd8] sm:$0xff]
    %v293 = vld [vmem:[%s2 + $0xe0] sm:$0xff]
    %v294 = vld [vmem:[%s2 + $0xe8] sm:$0xff]
    %v295 = vld [vmem:[%s2 + $0xf0] sm:$0xff]
    %v296 = vld [vmem:[%s2 + $0xf8] sm:$0xff]
    %298 = vset.pattern.permute.xlu0 0
    %299 = vperm.xlu0 %298, %v265
    %v300 = vpop.permute.xlu0 %299
    %303 = vset.pattern.permute.xlu0 0
    %304 = vperm.xlu0 %303, %v266
    %v305 = vpop.permute.xlu0 %304
    %308 = vset.pattern.permute.xlu0 0
    %309 = vperm.xlu0 %308, %v267
    %v310 = vpop.permute.xlu0 %309
    %313 = vset.pattern.permute.xlu0 0
    %314 = vperm.xlu0 %313, %v268
    %v315 = vpop.permute.xlu0 %314
    %318 = vset.pattern.permute.xlu0 0
    %319 = vperm.xlu0 %318, %v269
    %v320 = vpop.permute.xlu0 %319
    %323 = vset.pattern.permute.xlu0 0
    %324 = vperm.xlu0 %323, %v270
    %v325 = vpop.permute.xlu0 %324
    %328 = vset.pattern.permute.xlu0 0
    %329 = vperm.xlu0 %328, %v271
    %v330 = vpop.permute.xlu0 %329
    %333 = vset.pattern.permute.xlu0 0
    %334 = vperm.xlu0 %333, %v272
    %v335 = vpop.permute.xlu0 %334
    %338 = vset.pattern.permute.xlu0 0
    %339 = vperm.xlu0 %338, %v273
    %v340 = vpop.permute.xlu0 %339
    %343 = vset.pattern.permute.xlu0 0
    %344 = vperm.xlu0 %343, %v274
    %v345 = vpop.permute.xlu0 %344
    %348 = vset.pattern.permute.xlu0 0
    %349 = vperm.xlu0 %348, %v275
    %v350 = vpop.permute.xlu0 %349
    %353 = vset.pattern.permute.xlu0 0
    %354 = vperm.xlu0 %353, %v276
    %v355 = vpop.permute.xlu0 %354
    %358 = vset.pattern.permute.xlu0 0
    %359 = vperm.xlu0 %358, %v277
    %v360 = vpop.permute.xlu0 %359
    %363 = vset.pattern.permute.xlu0 0
    %364 = vperm.xlu0 %363, %v278
    %v365 = vpop.permute.xlu0 %364
    %368 = vset.pattern.permute.xlu0 0
    %369 = vperm.xlu0 %368, %v279
    %v370 = vpop.permute.xlu0 %369
    %373 = vset.pattern.permute.xlu0 0
    %374 = vperm.xlu0 %373, %v280
    %v375 = vpop.permute.xlu0 %374
    %378 = vset.pattern.permute.xlu0 0
    %379 = vperm.xlu0 %378, %v281
    %v380 = vpop.permute.xlu0 %379
    %383 = vset.pattern.permute.xlu0 0
    %384 = vperm.xlu0 %383, %v282
    %v385 = vpop.permute.xlu0 %384
    %388 = vset.pattern.permute.xlu0 0
    %389 = vperm.xlu0 %388, %v283
    %v390 = vpop.permute.xlu0 %389
    %393 = vset.pattern.permute.xlu0 0
    %394 = vperm.xlu0 %393, %v284
    %v395 = vpop.permute.xlu0 %394
    %398 = vset.pattern.permute.xlu0 0
    %399 = vperm.xlu0 %398, %v285
    %v400 = vpop.permute.xlu0 %399
    %403 = vset.pattern.permute.xlu0 0
    %404 = vperm.xlu0 %403, %v286
    %v405 = vpop.permute.xlu0 %404
    %408 = vset.pattern.permute.xlu0 0
    %409 = vperm.xlu0 %408, %v287
    %v410 = vpop.permute.xlu0 %409
    %413 = vset.pattern.permute.xlu0 0
    %414 = vperm.xlu0 %413, %v288
    %v415 = vpop.permute.xlu0 %414
    %418 = vset.pattern.permute.xlu0 0
    %419 = vperm.xlu0 %418, %v289
    %v420 = vpop.permute.xlu0 %419
    %423 = vset.pattern.permute.xlu0 0
    %424 = vperm.xlu0 %423, %v290
    %v425 = vpop.permute.xlu0 %424
    %428 = vset.pattern.permute.xlu0 0
    %429 = vperm.xlu0 %428, %v291
    %v430 = vpop.permute.xlu0 %429
    %433 = vset.pattern.permute.xlu0 0
    %434 = vperm.xlu0 %433, %v292
    %v435 = vpop.permute.xlu0 %434
    %438 = vset.pattern.permute.xlu0 0
    %439 = vperm.xlu0 %438, %v293
    %v440 = vpop.permute.xlu0 %439
    %443 = vset.pattern.permute.xlu0 0
    %444 = vperm.xlu0 %443, %v294
    %v445 = vpop.permute.xlu0 %444
    %448 = vset.pattern.permute.xlu0 0
    %449 = vperm.xlu0 %448, %v295
    %v450 = vpop.permute.xlu0 %449
    %453 = vset.pattern.permute.xlu0 0
    %454 = vperm.xlu0 %453, %v296
    %v455 = vpop.permute.xlu0 %454
    %v457 = vadd.f32 %v233, %v300
    %v458 = vadd.f32 %v234, %v305
    %v459 = vadd.f32 %v235, %v310
    %v460 = vadd.f32 %v236, %v315
    %v461 = vadd.f32 %v237, %v320
    %v462 = vadd.f32 %v238, %v325
    %v463 = vadd.f32 %v239, %v330
    %v464 = vadd.f32 %v240, %v335
    %v465 = vadd.f32 %v241, %v340
    %v466 = vadd.f32 %v242, %v345
    %v467 = vadd.f32 %v243, %v350
    %v468 = vadd.f32 %v244, %v355
    %v469 = vadd.f32 %v245, %v360
    %v470 = vadd.f32 %v246, %v365
    %v471 = vadd.f32 %v247, %v370
    %v472 = vadd.f32 %v248, %v375
    %v473 = vadd.f32 %v249, %v380
    %v474 = vadd.f32 %v250, %v385
    %v475 = vadd.f32 %v251, %v390
    %v476 = vadd.f32 %v252, %v395
    %v477 = vadd.f32 %v253, %v400
    %v478 = vadd.f32 %v254, %v405
    %v479 = vadd.f32 %v255, %v410
    %v480 = vadd.f32 %v256, %v415
    %v481 = vadd.f32 %v257, %v420
    %v482 = vadd.f32 %v258, %v425
    %v483 = vadd.f32 %v259, %v430
    %v484 = vadd.f32 %v260, %v435
    %v485 = vadd.f32 %v261, %v440
    %v486 = vadd.f32 %v262, %v445
    %v487 = vadd.f32 %v263, %v450
    %v488 = vadd.f32 %v264, %v455
    %v489 = vtanh.pop %v457
    %v490 = vtanh.pop %v458
    %v491 = vtanh.pop %v459
    %v492 = vtanh.pop %v460
    %v493 = vtanh.pop %v461
    %v494 = vtanh.pop %v462
    %v495 = vtanh.pop %v463
    %v496 = vtanh.pop %v464
    %v497 = vtanh.pop %v465
    %v498 = vtanh.pop %v466
    %v499 = vtanh.pop %v467
    %v500 = vtanh.pop %v468
    %v501 = vtanh.pop %v469
    %v502 = vtanh.pop %v470
    %v503 = vtanh.pop %v471
    %v504 = vtanh.pop %v472
    %v505 = vtanh.pop %v473
    %v506 = vtanh.pop %v474
    %v507 = vtanh.pop %v475
    %v508 = vtanh.pop %v476
    %v509 = vtanh.pop %v477
    %v510 = vtanh.pop %v478
    %v511 = vtanh.pop %v479
    %v512 = vtanh.pop %v480
    %v513 = vtanh.pop %v481
    %v514 = vtanh.pop %v482
    %v515 = vtanh.pop %v483
    %v516 = vtanh.pop %v484
    %v517 = vtanh.pop %v485
    %v518 = vtanh.pop %v486
    %v519 = vtanh.pop %v487
    %v520 = vtanh.pop %v488
    %v521 = vld [vmem:[%s3] sm:$0xff]
    %v522 = vld [vmem:[%s3 + $0x8] sm:$0xff]
    %v523 = vld [vmem:[%s3 + $0x10] sm:$0xff]
    %v524 = vld [vmem:[%s3 + $0x18] sm:$0xff]
    %v525 = vld [vmem:[%s3 + $0x20] sm:$0xff]
    %v526 = vld [vmem:[%s3 + $0x28] sm:$0xff]
    %v527 = vld [vmem:[%s3 + $0x30] sm:$0xff]
    %v528 = vld [vmem:[%s3 + $0x38] sm:$0xff]
    %v529 = vld [vmem:[%s3 + $0x40] sm:$0xff]
    %v530 = vld [vmem:[%s3 + $0x48] sm:$0xff]
    %v531 = vld [vmem:[%s3 + $0x50] sm:$0xff]
    %v532 = vld [vmem:[%s3 + $0x58] sm:$0xff]
    %v533 = vld [vmem:[%s3 + $0x60] sm:$0xff]
    %v534 = vld [vmem:[%s3 + $0x68] sm:$0xff]
    %v535 = vld [vmem:[%s3 + $0x70] sm:$0xff]
    %v536 = vld [vmem:[%s3 + $0x78] sm:$0xff]
    %v537 = vld [vmem:[%s3 + $0x80] sm:$0xff]
    %v538 = vld [vmem:[%s3 + $0x88] sm:$0xff]
    %v539 = vld [vmem:[%s3 + $0x90] sm:$0xff]
    %v540 = vld [vmem:[%s3 + $0x98] sm:$0xff]
    %v541 = vld [vmem:[%s3 + $0xa0] sm:$0xff]
    %v542 = vld [vmem:[%s3 + $0xa8] sm:$0xff]
    %v543 = vld [vmem:[%s3 + $0xb0] sm:$0xff]
    %v544 = vld [vmem:[%s3 + $0xb8] sm:$0xff]
    %v545 = vld [vmem:[%s3 + $0xc0] sm:$0xff]
    %v546 = vld [vmem:[%s3 + $0xc8] sm:$0xff]
    %v547 = vld [vmem:[%s3 + $0xd0] sm:$0xff]
    %v548 = vld [vmem:[%s3 + $0xd8] sm:$0xff]
    %v549 = vld [vmem:[%s3 + $0xe0] sm:$0xff]
    %v550 = vld [vmem:[%s3 + $0xe8] sm:$0xff]
    %v551 = vld [vmem:[%s3 + $0xf0] sm:$0xff]
    %v552 = vld [vmem:[%s3 + $0xf8] sm:$0xff]
    %v553 = vld [vmem:[%s3 + $0x100] sm:$0xff]
    %v554 = vld [vmem:[%s3 + $0x108] sm:$0xff]
    %v555 = vld [vmem:[%s3 + $0x110] sm:$0xff]
    %v556 = vld [vmem:[%s3 + $0x118] sm:$0xff]
    %v557 = vld [vmem:[%s3 + $0x120] sm:$0xff]
    %v558 = vld [vmem:[%s3 + $0x128] sm:$0xff]
    %v559 = vld [vmem:[%s3 + $0x130] sm:$0xff]
    %v560 = vld [vmem:[%s3 + $0x138] sm:$0xff]
    %v561 = vld [vmem:[%s3 + $0x140] sm:$0xff]
    %v562 = vld [vmem:[%s3 + $0x148] sm:$0xff]
    %v563 = vld [vmem:[%s3 + $0x150] sm:$0xff]
    %v564 = vld [vmem:[%s3 + $0x158] sm:$0xff]
    %v565 = vld [vmem:[%s3 + $0x160] sm:$0xff]
    %v566 = vld [vmem:[%s3 + $0x168] sm:$0xff]
    %v567 = vld [vmem:[%s3 + $0x170] sm:$0xff]
    %v568 = vld [vmem:[%s3 + $0x178] sm:$0xff]
    %v569 = vld [vmem:[%s3 + $0x180] sm:$0xff]
    %v570 = vld [vmem:[%s3 + $0x188] sm:$0xff]
    %v571 = vld [vmem:[%s3 + $0x190] sm:$0xff]
    %v572 = vld [vmem:[%s3 + $0x198] sm:$0xff]
    %v573 = vld [vmem:[%s3 + $0x1a0] sm:$0xff]
    %v574 = vld [vmem:[%s3 + $0x1a8] sm:$0xff]
    %v575 = vld [vmem:[%s3 + $0x1b0] sm:$0xff]
    %v576 = vld [vmem:[%s3 + $0x1b8] sm:$0xff]
    %v577 = vld [vmem:[%s3 + $0x1c0] sm:$0xff]
    %v578 = vld [vmem:[%s3 + $0x1c8] sm:$0xff]
    %v579 = vld [vmem:[%s3 + $0x1d0] sm:$0xff]
    %v580 = vld [vmem:[%s3 + $0x1d8] sm:$0xff]
    %v581 = vld [vmem:[%s3 + $0x1e0] sm:$0xff]
    %v582 = vld [vmem:[%s3 + $0x1e8] sm:$0xff]
    %v583 = vld [vmem:[%s3 + $0x1f0] sm:$0xff]
    %v584 = vld [vmem:[%s3 + $0x1f8] sm:$0xff]
    %v585 = vld [vmem:[%s4] sm:$0xff]
    %v586 = vld [vmem:[%s4 + $0x8] sm:$0xff]
    %v587 = vld [vmem:[%s4 + $0x10] sm:$0xff]
    %v588 = vld [vmem:[%s4 + $0x18] sm:$0xff]
    %v589 = vld [vmem:[%s4 + $0x20] sm:$0xff]
    %v590 = vld [vmem:[%s4 + $0x28] sm:$0xff]
    %v591 = vld [vmem:[%s4 + $0x30] sm:$0xff]
    %v592 = vld [vmem:[%s4 + $0x38] sm:$0xff]
    %v593 = vld [vmem:[%s4 + $0x40] sm:$0xff]
    %v594 = vld [vmem:[%s4 + $0x48] sm:$0xff]
    %v595 = vld [vmem:[%s4 + $0x50] sm:$0xff]
    %v596 = vld [vmem:[%s4 + $0x58] sm:$0xff]
    %v597 = vld [vmem:[%s4 + $0x60] sm:$0xff]
    %v598 = vld [vmem:[%s4 + $0x68] sm:$0xff]
    %v599 = vld [vmem:[%s4 + $0x70] sm:$0xff]
    %v600 = vld [vmem:[%s4 + $0x78] sm:$0xff]
    %v601 = vld [vmem:[%s4 + $0x80] sm:$0xff]
    %v602 = vld [vmem:[%s4 + $0x88] sm:$0xff]
    %v603 = vld [vmem:[%s4 + $0x90] sm:$0xff]
    %v604 = vld [vmem:[%s4 + $0x98] sm:$0xff]
    %v605 = vld [vmem:[%s4 + $0xa0] sm:$0xff]
    %v606 = vld [vmem:[%s4 + $0xa8] sm:$0xff]
    %v607 = vld [vmem:[%s4 + $0xb0] sm:$0xff]
    %v608 = vld [vmem:[%s4 + $0xb8] sm:$0xff]
    %v609 = vld [vmem:[%s4 + $0xc0] sm:$0xff]
    %v610 = vld [vmem:[%s4 + $0xc8] sm:$0xff]
    %v611 = vld [vmem:[%s4 + $0xd0] sm:$0xff]
    %v612 = vld [vmem:[%s4 + $0xd8] sm:$0xff]
    %v613 = vld [vmem:[%s4 + $0xe0] sm:$0xff]
    %v614 = vld [vmem:[%s4 + $0xe8] sm:$0xff]
    %v615 = vld [vmem:[%s4 + $0xf0] sm:$0xff]
    %v616 = vld [vmem:[%s4 + $0xf8] sm:$0xff]
    %618 = vset.pattern.permute.xlu0 0
    %619 = vperm.xlu0 %618, %v585
    %v620 = vpop.permute.xlu0 %619
    %623 = vset.pattern.permute.xlu0 0
    %624 = vperm.xlu0 %623, %v586
    %v625 = vpop.permute.xlu0 %624
    %628 = vset.pattern.permute.xlu0 0
    %629 = vperm.xlu0 %628, %v587
    %v630 = vpop.permute.xlu0 %629
    %633 = vset.pattern.permute.xlu0 0
    %634 = vperm.xlu0 %633, %v588
    %v635 = vpop.permute.xlu0 %634
    %638 = vset.pattern.permute.xlu0 0
    %639 = vperm.xlu0 %638, %v589
    %v640 = vpop.permute.xlu0 %639
    %643 = vset.pattern.permute.xlu0 0
    %644 = vperm.xlu0 %643, %v590
    %v645 = vpop.permute.xlu0 %644
    %648 = vset.pattern.permute.xlu0 0
    %649 = vperm.xlu0 %648, %v591
    %v650 = vpop.permute.xlu0 %649
    %653 = vset.pattern.permute.xlu0 0
    %654 = vperm.xlu0 %653, %v592
    %v655 = vpop.permute.xlu0 %654
    %658 = vset.pattern.permute.xlu0 0
    %659 = vperm.xlu0 %658, %v593
    %v660 = vpop.permute.xlu0 %659
    %663 = vset.pattern.permute.xlu0 0
    %664 = vperm.xlu0 %663, %v594
    %v665 = vpop.permute.xlu0 %664
    %668 = vset.pattern.permute.xlu0 0
    %669 = vperm.xlu0 %668, %v595
    %v670 = vpop.permute.xlu0 %669
    %673 = vset.pattern.permute.xlu0 0
    %674 = vperm.xlu0 %673, %v596
    %v675 = vpop.permute.xlu0 %674
    %678 = vset.pattern.permute.xlu0 0
    %679 = vperm.xlu0 %678, %v597
    %v680 = vpop.permute.xlu0 %679
    %683 = vset.pattern.permute.xlu0 0
    %684 = vperm.xlu0 %683, %v598
    %v685 = vpop.permute.xlu0 %684
    %688 = vset.pattern.permute.xlu0 0
    %689 = vperm.xlu0 %688, %v599
    %v690 = vpop.permute.xlu0 %689
    %693 = vset.pattern.permute.xlu0 0
    %694 = vperm.xlu0 %693, %v600
    %v695 = vpop.permute.xlu0 %694
    %698 = vset.pattern.permute.xlu0 0
    %699 = vperm.xlu0 %698, %v601
    %v700 = vpop.permute.xlu0 %699
    %703 = vset.pattern.permute.xlu0 0
    %704 = vperm.xlu0 %703, %v602
    %v705 = vpop.permute.xlu0 %704
    %708 = vset.pattern.permute.xlu0 0
    %709 = vperm.xlu0 %708, %v603
    %v710 = vpop.permute.xlu0 %709
    %713 = vset.pattern.permute.xlu0 0
    %714 = vperm.xlu0 %713, %v604
    %v715 = vpop.permute.xlu0 %714
    %718 = vset.pattern.permute.xlu0 0
    %719 = vperm.xlu0 %718, %v605
    %v720 = vpop.permute.xlu0 %719
    %723 = vset.pattern.permute.xlu0 0
    %724 = vperm.xlu0 %723, %v606
    %v725 = vpop.permute.xlu0 %724
    %728 = vset.pattern.permute.xlu0 0
    %729 = vperm.xlu0 %728, %v607
    %v730 = vpop.permute.xlu0 %729
    %733 = vset.pattern.permute.xlu0 0
    %734 = vperm.xlu0 %733, %v608
    %v735 = vpop.permute.xlu0 %734
    %738 = vset.pattern.permute.xlu0 0
    %739 = vperm.xlu0 %738, %v609
    %v740 = vpop.permute.xlu0 %739
    %743 = vset.pattern.permute.xlu0 0
    %744 = vperm.xlu0 %743, %v610
    %v745 = vpop.permute.xlu0 %744
    %748 = vset.pattern.permute.xlu0 0
    %749 = vperm.xlu0 %748, %v611
    %v750 = vpop.permute.xlu0 %749
    %753 = vset.pattern.permute.xlu0 0
    %754 = vperm.xlu0 %753, %v612
    %v755 = vpop.permute.xlu0 %754
    %758 = vset.pattern.permute.xlu0 0
    %759 = vperm.xlu0 %758, %v613
    %v760 = vpop.permute.xlu0 %759
    %763 = vset.pattern.permute.xlu0 0
    %764 = vperm.xlu0 %763, %v614
    %v765 = vpop.permute.xlu0 %764
    %768 = vset.pattern.permute.xlu0 0
    %769 = vperm.xlu0 %768, %v615
    %v770 = vpop.permute.xlu0 %769
    %773 = vset.pattern.permute.xlu0 0
    %774 = vperm.xlu0 %773, %v616
    %v775 = vpop.permute.xlu0 %774
    %777 = vmatpush.msra.mxu0 %v504
    %778 = vmatpush.msra.mxu0 %v503
    %779 = vmatpush.msra.mxu0 %v502
    %780 = vmatpush.msra.mxu0 %v501
    %781 = vmatpush.msra.mxu0 %v500
    %782 = vmatpush.msra.mxu0 %v499
    %783 = vmatpush.msra.mxu0 %v498
    %784 = vmatpush.msra.mxu0 %v497
    %785 = vmatpush.msra.mxu0 %v496
    %786 = vmatpush.msra.mxu0 %v495
    %787 = vmatpush.msra.mxu0 %v494
    %788 = vmatpush.msra.mxu0 %v493
    %789 = vmatpush.msra.mxu0 %v492
    %790 = vmatpush.msra.mxu0 %v491
    %791 = vmatpush.msra.mxu0 %v490
    %792 = vmatpush.msra.mxu0 %v489
    %793 = vmatmul.f32.gmra.mxu0 %v521
    %v794 = vpop.f32.mrf.mxu0
    %v795 = vadd.f32 %v620, %v794
    %796 = vmatmul.f32.gmra.mxu0 %v523
    %v797 = vpop.f32.mrf.mxu0
    %v798 = vadd.f32 %v625, %v797
    %799 = vmatmul.f32.gmra.mxu0 %v525
    %v800 = vpop.f32.mrf.mxu0
    %v801 = vadd.f32 %v630, %v800
    %802 = vmatmul.f32.gmra.mxu0 %v527
    %v803 = vpop.f32.mrf.mxu0
    %v804 = vadd.f32 %v635, %v803
    %805 = vmatmul.f32.gmra.mxu0 %v529
    %v806 = vpop.f32.mrf.mxu0
    %v807 = vadd.f32 %v640, %v806
    %808 = vmatmul.f32.gmra.mxu0 %v531
    %v809 = vpop.f32.mrf.mxu0
    %v810 = vadd.f32 %v645, %v809
    %811 = vmatmul.f32.gmra.mxu0 %v533
    %v812 = vpop.f32.mrf.mxu0
    %v813 = vadd.f32 %v650, %v812
    %814 = vmatmul.f32.gmra.mxu0 %v535
    %v815 = vpop.f32.mrf.mxu0
    %v816 = vadd.f32 %v655, %v815
    %817 = vmatmul.f32.gmra.mxu0 %v537
    %v818 = vpop.f32.mrf.mxu0
    %v819 = vadd.f32 %v660, %v818
    %820 = vmatmul.f32.gmra.mxu0 %v539
    %v821 = vpop.f32.mrf.mxu0
    %v822 = vadd.f32 %v665, %v821
    %823 = vmatmul.f32.gmra.mxu0 %v541
    %v824 = vpop.f32.mrf.mxu0
    %v825 = vadd.f32 %v670, %v824
    %826 = vmatmul.f32.gmra.mxu0 %v543
    %v827 = vpop.f32.mrf.mxu0
    %v828 = vadd.f32 %v675, %v827
    %829 = vmatmul.f32.gmra.mxu0 %v545
    %v830 = vpop.f32.mrf.mxu0
    %v831 = vadd.f32 %v680, %v830
    %832 = vmatmul.f32.gmra.mxu0 %v547
    %v833 = vpop.f32.mrf.mxu0
    %v834 = vadd.f32 %v685, %v833
    %835 = vmatmul.f32.gmra.mxu0 %v549
    %v836 = vpop.f32.mrf.mxu0
    %v837 = vadd.f32 %v690, %v836
    %838 = vmatmul.f32.gmra.mxu0 %v551
    %v839 = vpop.f32.mrf.mxu0
    %v840 = vadd.f32 %v695, %v839
    %841 = vmatmul.f32.gmra.mxu0 %v553
    %v842 = vpop.f32.mrf.mxu0
    %v843 = vadd.f32 %v700, %v842
    %844 = vmatmul.f32.gmra.mxu0 %v555
    %v845 = vpop.f32.mrf.mxu0
    %v846 = vadd.f32 %v705, %v845
    %847 = vmatmul.f32.gmra.mxu0 %v557
    %v848 = vpop.f32.mrf.mxu0
    %v849 = vadd.f32 %v710, %v848
    %850 = vmatmul.f32.gmra.mxu0 %v559
    %v851 = vpop.f32.mrf.mxu0
    %v852 = vadd.f32 %v715, %v851
    %853 = vmatmul.f32.gmra.mxu0 %v561
    %v854 = vpop.f32.mrf.mxu0
    %v855 = vadd.f32 %v720, %v854
    %856 = vmatmul.f32.gmra.mxu0 %v563
    %v857 = vpop.f32.mrf.mxu0
    %v858 = vadd.f32 %v725, %v857
    %859 = vmatmul.f32.gmra.mxu0 %v565
    %v860 = vpop.f32.mrf.mxu0
    %v861 = vadd.f32 %v730, %v860
    %862 = vmatmul.f32.gmra.mxu0 %v567
    %v863 = vpop.f32.mrf.mxu0
    %v864 = vadd.f32 %v735, %v863
    %865 = vmatmul.f32.gmra.mxu0 %v569
    %v866 = vpop.f32.mrf.mxu0
    %v867 = vadd.f32 %v740, %v866
    %868 = vmatmul.f32.gmra.mxu0 %v571
    %v869 = vpop.f32.mrf.mxu0
    %v870 = vadd.f32 %v745, %v869
    %871 = vmatmul.f32.gmra.mxu0 %v573
    %v872 = vpop.f32.mrf.mxu0
    %v873 = vadd.f32 %v750, %v872
    %874 = vmatmul.f32.gmra.mxu0 %v575
    %v875 = vpop.f32.mrf.mxu0
    %v876 = vadd.f32 %v755, %v875
    %877 = vmatmul.f32.gmra.mxu0 %v577
    %v878 = vpop.f32.mrf.mxu0
    %v879 = vadd.f32 %v760, %v878
    %880 = vmatmul.f32.gmra.mxu0 %v579
    %v881 = vpop.f32.mrf.mxu0
    %v882 = vadd.f32 %v765, %v881
    %883 = vmatmul.f32.gmra.mxu0 %v581
    %v884 = vpop.f32.mrf.mxu0
    %v885 = vadd.f32 %v770, %v884
    %886 = vmatmul.f32.gmra.mxu0 %v583
    %v887 = vpop.f32.mrf.mxu0
    %v888 = vadd.f32 %v775, %v887
    %889 = vdwg.mxu0
    %890 = vmatpush.msra.mxu0 %v520
    %891 = vmatpush.msra.mxu0 %v519
    %892 = vmatpush.msra.mxu0 %v518
    %893 = vmatpush.msra.mxu0 %v517
    %894 = vmatpush.msra.mxu0 %v516
    %895 = vmatpush.msra.mxu0 %v515
    %896 = vmatpush.msra.mxu0 %v514
    %897 = vmatpush.msra.mxu0 %v513
    %898 = vmatpush.msra.mxu0 %v512
    %899 = vmatpush.msra.mxu0 %v511
    %900 = vmatpush.msra.mxu0 %v510
    %901 = vmatpush.msra.mxu0 %v509
    %902 = vmatpush.msra.mxu0 %v508
    %903 = vmatpush.msra.mxu0 %v507
    %904 = vmatpush.msra.mxu0 %v506
    %905 = vmatpush.msra.mxu0 %v505
    %906 = vmatmul.f32.gmra.mxu0 %v522
    %v907 = vpop.f32.mrf.mxu0
    %v908 = vadd.f32 %v795, %v907
    %909 = vmatmul.f32.gmra.mxu0 %v524
    %v910 = vpop.f32.mrf.mxu0
    %v911 = vadd.f32 %v798, %v910
    %912 = vmatmul.f32.gmra.mxu0 %v526
    %v913 = vpop.f32.mrf.mxu0
    %v914 = vadd.f32 %v801, %v913
    %915 = vmatmul.f32.gmra.mxu0 %v528
    %v916 = vpop.f32.mrf.mxu0
    %v917 = vadd.f32 %v804, %v916
    %918 = vmatmul.f32.gmra.mxu0 %v530
    %v919 = vpop.f32.mrf.mxu0
    %v920 = vadd.f32 %v807, %v919
    %921 = vmatmul.f32.gmra.mxu0 %v532
    %v922 = vpop.f32.mrf.mxu0
    %v923 = vadd.f32 %v810, %v922
    %924 = vmatmul.f32.gmra.mxu0 %v534
    %v925 = vpop.f32.mrf.mxu0
    %v926 = vadd.f32 %v813, %v925
    %927 = vmatmul.f32.gmra.mxu0 %v536
    %v928 = vpop.f32.mrf.mxu0
    %v929 = vadd.f32 %v816, %v928
    %930 = vmatmul.f32.gmra.mxu0 %v538
    %v931 = vpop.f32.mrf.mxu0
    %v932 = vadd.f32 %v819, %v931
    %933 = vmatmul.f32.gmra.mxu0 %v540
    %v934 = vpop.f32.mrf.mxu0
    %v935 = vadd.f32 %v822, %v934
    %936 = vmatmul.f32.gmra.mxu0 %v542
    %v937 = vpop.f32.mrf.mxu0
    %v938 = vadd.f32 %v825, %v937
    %939 = vmatmul.f32.gmra.mxu0 %v544
    %v940 = vpop.f32.mrf.mxu0
    %v941 = vadd.f32 %v828, %v940
    %942 = vmatmul.f32.gmra.mxu0 %v546
    %v943 = vpop.f32.mrf.mxu0
    %v944 = vadd.f32 %v831, %v943
    %945 = vmatmul.f32.gmra.mxu0 %v548
    %v946 = vpop.f32.mrf.mxu0
    %v947 = vadd.f32 %v834, %v946
    %948 = vmatmul.f32.gmra.mxu0 %v550
    %v949 = vpop.f32.mrf.mxu0
    %v950 = vadd.f32 %v837, %v949
    %951 = vmatmul.f32.gmra.mxu0 %v552
    %v952 = vpop.f32.mrf.mxu0
    %v953 = vadd.f32 %v840, %v952
    %954 = vmatmul.f32.gmra.mxu0 %v554
    %v955 = vpop.f32.mrf.mxu0
    %v956 = vadd.f32 %v843, %v955
    %957 = vmatmul.f32.gmra.mxu0 %v556
    %v958 = vpop.f32.mrf.mxu0
    %v959 = vadd.f32 %v846, %v958
    %960 = vmatmul.f32.gmra.mxu0 %v558
    %v961 = vpop.f32.mrf.mxu0
    %v962 = vadd.f32 %v849, %v961
    %963 = vmatmul.f32.gmra.mxu0 %v560
    %v964 = vpop.f32.mrf.mxu0
    %v965 = vadd.f32 %v852, %v964
    %966 = vmatmul.f32.gmra.mxu0 %v562
    %v967 = vpop.f32.mrf.mxu0
    %v968 = vadd.f32 %v855, %v967
    %969 = vmatmul.f32.gmra.mxu0 %v564
    %v970 = vpop.f32.mrf.mxu0
    %v971 = vadd.f32 %v858, %v970
    %972 = vmatmul.f32.gmra.mxu0 %v566
    %v973 = vpop.f32.mrf.mxu0
    %v974 = vadd.f32 %v861, %v973
    %975 = vmatmul.f32.gmra.mxu0 %v568
    %v976 = vpop.f32.mrf.mxu0
    %v977 = vadd.f32 %v864, %v976
    %978 = vmatmul.f32.gmra.mxu0 %v570
    %v979 = vpop.f32.mrf.mxu0
    %v980 = vadd.f32 %v867, %v979
    %981 = vmatmul.f32.gmra.mxu0 %v572
    %v982 = vpop.f32.mrf.mxu0
    %v983 = vadd.f32 %v870, %v982
    %984 = vmatmul.f32.gmra.mxu0 %v574
    %v985 = vpop.f32.mrf.mxu0
    %v986 = vadd.f32 %v873, %v985
    %987 = vmatmul.f32.gmra.mxu0 %v576
    %v988 = vpop.f32.mrf.mxu0
    %v989 = vadd.f32 %v876, %v988
    %990 = vmatmul.f32.gmra.mxu0 %v578
    %v991 = vpop.f32.mrf.mxu0
    %v992 = vadd.f32 %v879, %v991
    %993 = vmatmul.f32.gmra.mxu0 %v580
    %v994 = vpop.f32.mrf.mxu0
    %v995 = vadd.f32 %v882, %v994
    %996 = vmatmul.f32.gmra.mxu0 %v582
    %v997 = vpop.f32.mrf.mxu0
    %v998 = vadd.f32 %v885, %v997
    %999 = vmatmul.f32.gmra.mxu0 %v584
    %v1000 = vpop.f32.mrf.mxu0
    %v1001 = vadd.f32 %v888, %v1000
    %1002 = vdwg.mxu0
    %v1003 = vtanh.pop %v908
    %v1004 = vtanh.pop %v911
    %v1005 = vtanh.pop %v914
    %v1006 = vtanh.pop %v917
    %v1007 = vtanh.pop %v920
    %v1008 = vtanh.pop %v923
    %v1009 = vtanh.pop %v926
    %v1010 = vtanh.pop %v929
    %v1011 = vtanh.pop %v932
    %v1012 = vtanh.pop %v935
    %v1013 = vtanh.pop %v938
    %v1014 = vtanh.pop %v941
    %v1015 = vtanh.pop %v944
    %v1016 = vtanh.pop %v947
    %v1017 = vtanh.pop %v950
    %v1018 = vtanh.pop %v953
    %v1019 = vtanh.pop %v956
    %v1020 = vtanh.pop %v959
    %v1021 = vtanh.pop %v962
    %v1022 = vtanh.pop %v965
    %v1023 = vtanh.pop %v968
    %v1024 = vtanh.pop %v971
    %v1025 = vtanh.pop %v974
    %v1026 = vtanh.pop %v977
    %v1027 = vtanh.pop %v980
    %v1028 = vtanh.pop %v983
    %v1029 = vtanh.pop %v986
    %v1030 = vtanh.pop %v989
    %v1031 = vtanh.pop %v992
    %v1032 = vtanh.pop %v995
    %v1033 = vtanh.pop %v998
    %v1034 = vtanh.pop %v1001
    %v1035 = vld [vmem:[%s5] sm:$0xff]
    %s1036 = sld [smem:[#allocation2]]
    %v1037 = vstv %s1036
    %1039 = vst [vmem:[#allocation1] ss:$2 sm:$0xff] %v1035
    %v1040 = vld.sshfl [vmem:[#allocation1] sm:$0xff pattern:$0x75316420]
    %v1041 = vld.sshfl [vmem:[#allocation1 + $0x8] sm:$0xff pattern:$0x75316420]
    %1044 = vmatpush.msra.mxu0 %v1018
    %1045 = vmatpush.msra.mxu0 %v1017
    %1046 = vmatpush.msra.mxu0 %v1016
    %1047 = vmatpush.msra.mxu0 %v1015
    %1048 = vmatpush.msra.mxu0 %v1014
    %1049 = vmatpush.msra.mxu0 %v1013
    %1050 = vmatpush.msra.mxu0 %v1012
    %1051 = vmatpush.msra.mxu0 %v1011
    %1052 = vmatpush.msra.mxu0 %v1010
    %1053 = vmatpush.msra.mxu0 %v1009
    %1054 = vmatpush.msra.mxu0 %v1008
    %1055 = vmatpush.msra.mxu0 %v1007
    %1056 = vmatpush.msra.mxu0 %v1006
    %1057 = vmatpush.msra.mxu0 %v1005
    %1058 = vmatpush.msra.mxu0 %v1004
    %1059 = vmatpush.msra.mxu0 %v1003
    %1060 = vmatmul.f32.gmra.mxu0 %v1040
    %v1061 = vpop.f32.mrf.mxu0
    %v1062 = vadd.f32 %v1037, %v1061
    %1063 = vdwg.mxu0
    %1064 = vmatpush.msra.mxu0 %v1034
    %1065 = vmatpush.msra.mxu0 %v1033
    %1066 = vmatpush.msra.mxu0 %v1032
    %1067 = vmatpush.msra.mxu0 %v1031
    %1068 = vmatpush.msra.mxu0 %v1030
    %1069 = vmatpush.msra.mxu0 %v1029
    %1070 = vmatpush.msra.mxu0 %v1028
    %1071 = vmatpush.msra.mxu0 %v1027
    %1072 = vmatpush.msra.mxu0 %v1026
    %1073 = vmatpush.msra.mxu0 %v1025
    %1074 = vmatpush.msra.mxu0 %v1024
    %1075 = vmatpush.msra.mxu0 %v1023
    %1076 = vmatpush.msra.mxu0 %v1022
    %1077 = vmatpush.msra.mxu0 %v1021
    %1078 = vmatpush.msra.mxu0 %v1020
    %1079 = vmatpush.msra.mxu0 %v1019
    %1080 = vmatmul.f32.gmra.mxu0 %v1041
    %v1081 = vpop.f32.mrf.mxu0
    %v1082 = vadd.f32 %v1062, %v1081
    %1083 = vdwg.mxu0
    %1084 = vst [vmem:[#allocation3] sm:$0xf] %v1082
    // Predicated region
    $region30: #{tpu_custom_call.1} parent=1 // pred_check
      _
    $region31: #{tpu_custom_call.1} parent=1 // pred_check_branch
      %1086 = sbr.rel (0) target = $region33
    $region32: #{tpu_custom_call.1} parent=1 // pred_region
      %1088 = vsyncadd [#allocation4], 0
      %s1090 = sshll.u32 [#allocation3], 4
      %s1091 = int_to_ptr.vmem [resolvable:$true] %s1090
      %s1092 = sshll.u32 %s7, 4
      %s1093 = int_to_ptr.hbm [resolvable:$true] %s1092
      %1095 = dma.vmem_to_hbm [thread:$0]  %s1091, 64, %s1093, [#allocation4]
    $region33: #{tpu_custom_call.1} parent=1 // pred_fallthru
      _
    // Predicated region
    $region34: #{tpu_custom_call.1} parent=1 // pred_check
      _
    $region35: #{tpu_custom_call.1} parent=1 // pred_check_branch
      %1097 = sbr.rel (0) target = $region37
    $region36: #{tpu_custom_call.1} parent=1 // pred_region
      %1099 = dma.done [#allocation4], 64
    $region37: #{tpu_custom_call.1} parent=1 // pred_fallthru
      _
    %1100 = vsyncpa [#allocation4], 1

</llo_original>
